<compile_context>
chip_gen: v5e
topology: v5e:2x2
jax: 0.10.0
libtpu: 0.0.40
codegen_flags: <defaults>
</compile_context>

<pallas_src>
import jax
import jax.numpy as jnp
from jax.experimental import pallas as pl
from jax.experimental.pallas import tpu as pltpu

B, T, C, K = 2, 64, 128, 3          # batch, time, channels, depthwise kernel size
PAD = (K - 1) // 2
BN_EPS = 1e-5


def _time_mask(length, t):
    """[t, 1] f32 mask: 1.0 for time rows < length, else 0.0 (built on the VPU)."""
    rows = jax.lax.broadcasted_iota(jnp.int32, (t, 1), 0)
    return (rows < length).astype(jnp.float32)


def pass1_kernel(lens_ref, x_ref, w1a_ref, w1b_ref, b1a_ref, b1b_ref,
                 wdw_ref, bdw_ref, d_ref, sum_ref, sq_ref, gpad_ref):
    """Linear1 + GLU + mask + depthwise conv; emits d and per-batch BN partials."""
    b = pl.program_id(0)
    t = x_ref.shape[0]

    # ---- pointwise_conv1 + GLU: two lane-aligned bf16 MXU matmuls ------------
    xb = x_ref[...].astype(jnp.bfloat16)                            # [T, C]
    val = jnp.dot(xb, w1a_ref[...], preferred_element_type=jnp.float32) + b1a_ref[...]
    gate = jnp.dot(xb, w1b_ref[...], preferred_element_type=jnp.float32) + b1b_ref[...]
    g = val * jax.nn.sigmoid(gate)                                  # [T, C] f32

    # ---- masked_fill(~mask, 0): padding mask from lengths --------------------
    g = g * _time_mask(lens_ref[b], t)

    # ---- depthwise conv along time via padded VMEM scratch (no concatenate) --
    zero_halo = jnp.zeros((PAD, g.shape[1]), jnp.float32)
    gpad_ref[pl.ds(0, PAD), :] = zero_halo
    gpad_ref[pl.ds(PAD + t, PAD), :] = zero_halo
    gpad_ref[pl.ds(PAD, t), :] = g
    wdw = wdw_ref[...]                                              # [K, C]
    acc = gpad_ref[pl.ds(0, t), :] * wdw[0]
    for j in range(1, K):                                           # static unroll
        acc = acc + gpad_ref[pl.ds(j, t), :] * wdw[j]
    acc = acc + bdw_ref[...]                                        # [1, C]

    d_ref[...] = acc
    # one-pass BatchNorm partials: per-batch per-channel sum and sum of squares
    sum_ref[...] = jnp.sum(acc, axis=0, keepdims=True)
    sq_ref[...] = jnp.sum(acc * acc, axis=0, keepdims=True)


def pass2_kernel(lens_ref, d_ref, scale_ref, shift_ref, w2_ref, b2_ref, o_ref):
    """Fused BN scale/shift + swish + Linear2 (bf16 MXU) + mask."""
    b = pl.program_id(0)
    t = d_ref.shape[0]
    y = d_ref[...] * scale_ref[...] + shift_ref[...]                # folded BN affine
    y = y * jax.nn.sigmoid(y)                                       # swish (f32)
    out = jnp.dot(y.astype(jnp.bfloat16), w2_ref[...],
                  preferred_element_type=jnp.float32) + b2_ref[...]
    o_ref[...] = out * _time_mask(lens_ref[b], t)


def conformer_conv_module(x, lengths, params):
    """x: [B, T, C] f32, lengths: [B] int32 (standard padding mask)."""
    b, t, c = x.shape

    # Blocked specs (batch dim squeezed); index_maps receive the prefetch ref too.
    btc = pl.BlockSpec((None, t, c), lambda i, lens: (i, 0, 0))
    b1c = pl.BlockSpec((None, 1, c), lambda i, lens: (i, 0, 0))

    def full(shape):  # whole-array block, constant index map (weights / biases)
        return pl.BlockSpec(shape, lambda i, lens: (0,) * len(shape))

    parallel = pltpu.CompilerParams(dimension_semantics=("parallel",))

    # ---- pass 1: Linear1 + GLU + mask + depthwise conv + BN partials ---------
    d, dsum, dsq = pl.pallas_call(
        pass1_kernel,
        grid_spec=pltpu.PrefetchScalarGridSpec(
            num_scalar_prefetch=1,
            grid=(b,),
            in_specs=[btc,
                      full((c, c)), full((c, c)), full((1, c)), full((1, c)),
                      full((K, c)), full((1, c))],
            out_specs=(btc, b1c, b1c),
            scratch_shapes=[pltpu.VMEM((t + 2 * PAD, c), jnp.float32)]),
        out_shape=(jax.ShapeDtypeStruct((b, t, c), jnp.float32),
                   jax.ShapeDtypeStruct((b, 1, c), jnp.float32),
                   jax.ShapeDtypeStruct((b, 1, c), jnp.float32)),
        compiler_params=parallel,
    )(lengths, x, params['w1a'], params['w1b'], params['b1a'], params['b1b'],
      params['wdw'], params['bdw'])

    # ---- tiny [C]-sized BN stat reduction + affine folding (plain JAX) -------
    n = b * t
    mean = jnp.sum(dsum[:, 0, :], axis=0) / n
    var = jnp.sum(dsq[:, 0, :], axis=0) / n - mean * mean
    scale = params['gamma'] * jax.lax.rsqrt(var + BN_EPS)
    shift = params['beta'] - mean * scale

    # ---- pass 2: BN scale/shift + swish + Linear2 + mask ----------------------
    out = pl.pallas_call(
        pass2_kernel,
        grid_spec=pltpu.PrefetchScalarGridSpec(
            num_scalar_prefetch=1,
            grid=(b,),
            in_specs=[btc, full((1, c)), full((1, c)), full((c, c)), full((1, c))],
            out_specs=btc),
        out_shape=jax.ShapeDtypeStruct((b, t, c), jnp.float32),
        compiler_params=parallel,
    )(lengths, d, scale.reshape(1, c), shift.reshape(1, c),
      params['w2'], params['b2'])
    return out


def reference(x, lengths, params):
    """Pure-JAX reference with identical math (bf16 matmul operands, f32 accum)."""
    b, t, c = x.shape
    m = (jnp.arange(t)[None, :, None] < lengths[:, None, None]).astype(jnp.float32)
    x2 = x.astype(jnp.bfloat16).reshape(b * t, c)
    val = (jnp.dot(x2, params['w1a'], preferred_element_type=jnp.float32)
           .reshape(b, t, c) + params['b1a'])
    gate = (jnp.dot(x2, params['w1b'], preferred_element_type=jnp.float32)
            .reshape(b, t, c) + params['b1b'])
    g = val * jax.nn.sigmoid(gate) * m
    gp = jnp.pad(g, ((0, 0), (PAD, PAD), (0, 0)))
    d = sum(gp[:, j:j + t, :] * params['wdw'][j] for j in range(K)) + params['bdw']
    mean = jnp.mean(d, axis=(0, 1))
    var = jnp.mean(d * d, axis=(0, 1)) - mean * mean
    scale = params['gamma'] * jax.lax.rsqrt(var + BN_EPS)
    shift = params['beta'] - mean * scale
    y = d * scale + shift
    y = y * jax.nn.sigmoid(y)
    out = (jnp.dot(y.astype(jnp.bfloat16).reshape(b * t, c), params['w2'],
                   preferred_element_type=jnp.float32).reshape(b, t, c)
           + params['b2'])
    return out * m


def init_params(key):
    ks = jax.random.split(key, 6)
    # nn.Linear(C, 2C): weight [2C, C], bias [2C].
    w1 = jax.random.normal(ks[0], (2 * C, C), jnp.float32) * 0.1
    b1 = jax.random.normal(ks[1], (2 * C,), jnp.float32) * 0.1
    # nn.Conv1d(C, C, K, groups=C): weight [C, 1, K], bias [C].
    wdw = jax.random.normal(ks[2], (C, 1, K), jnp.float32) * 0.1
    bdw = jax.random.normal(ks[3], (C,), jnp.float32) * 0.1
    # BatchNorm1d affine (PyTorch init: gamma=1, beta=0).
    gamma = jnp.ones((C,), jnp.float32)
    beta = jnp.zeros((C,), jnp.float32)
    # nn.Linear(C, C): weight [C, C], bias [C].
    w2 = jax.random.normal(ks[4], (C, C), jnp.float32) * 0.1
    b2 = jax.random.normal(ks[5], (C,), jnp.float32) * 0.1
    w1t = jnp.transpose(w1)                                   # [C, 2C]
    return {
        'w1a': w1t[:, :C].astype(jnp.bfloat16),               # GLU "value" half
        'w1b': w1t[:, C:].astype(jnp.bfloat16),               # GLU "gate" half
        'b1a': b1[:C].reshape(1, C),
        'b1b': b1[C:].reshape(1, C),
        'wdw': jnp.transpose(wdw[:, 0, :]),                   # [K, C]
        'bdw': bdw.reshape(1, C),
        'gamma': gamma,
        'beta': beta,
        'w2': jnp.transpose(w2).astype(jnp.bfloat16),         # [C, C]
        'b2': b2.reshape(1, C),
    }
    # TODO(synk): nn.Dropout exists in __init__ but is never applied in forward; omitted.


if __name__ == "__main__":
    key = jax.random.PRNGKey(0)
    kx, kp = jax.random.split(key)
    x = jax.random.normal(kx, (B, T, C), jnp.float32)
    # deterministic padding mask: batch 0 full length, batch 1 length T-17
    lengths = jnp.array([T, T - 17], jnp.int32)
    params = init_params(kp)

    out = jax.block_until_ready(conformer_conv_module(x, lengths, params))
    ref = jax.block_until_ready(reference(x, lengths, params))
    assert out.shape == (B, T, C)
    # tolerance accounts for bf16 matmul-operand rounding + f32 reduction-order diffs
    err = float(jnp.max(jnp.abs(out - ref)))
    assert jnp.allclose(out, ref, atol=2e-2, rtol=2e-2), f"mismatch vs reference, max abs err {err}"
    print("KERNEL_OK")
</pallas_src>

<mosaic_0001>
module attributes {stable_mosaic.version = 11 : i64} {
  func.func @pass1_kernel(%arg0: i32, %arg1: memref<2xi32, #tpu.memory_space<smem>>, %arg2: memref<1x64x128xf32, #tpu.memory_space<vmem>>, %arg3: memref<128x128xbf16, #tpu.memory_space<vmem>>, %arg4: memref<128x128xbf16, #tpu.memory_space<vmem>>, %arg5: memref<1x128xf32, #tpu.memory_space<vmem>>, %arg6: memref<1x128xf32, #tpu.memory_space<vmem>>, %arg7: memref<3x128xf32, #tpu.memory_space<vmem>>, %arg8: memref<1x128xf32, #tpu.memory_space<vmem>>, %arg9: memref<1x64x128xf32, #tpu.memory_space<vmem>>, %arg10: memref<1x1x128xf32, #tpu.memory_space<vmem>>, %arg11: memref<1x1x128xf32, #tpu.memory_space<vmem>>, %arg12: memref<66x128xf32, #tpu.memory_space<vmem>>) attributes {dimension_semantics = [#tpu.dimension_semantics<parallel>], iteration_bounds = array<i64: 2>, scalar_prefetch = 1 : i64, scratch_operands = 1 : i64, tpu.core_type = #tpu.core_type<tc>, window_params = [{transform_indices = @transform_0, window_bounds = array<i64: 1, 64, 128>}, {pipeline_mode = #tpu.pipeline_mode<synchronous>, transform_indices = @transform_1, window_bounds = array<i64: 128, 128>}, {pipeline_mode = #tpu.pipeline_mode<synchronous>, transform_indices = @transform_2, window_bounds = array<i64: 128, 128>}, {pipeline_mode = #tpu.pipeline_mode<synchronous>, transform_indices = @transform_3, window_bounds = array<i64: 1, 128>}, {pipeline_mode = #tpu.pipeline_mode<synchronous>, transform_indices = @transform_4, window_bounds = array<i64: 1, 128>}, {pipeline_mode = #tpu.pipeline_mode<synchronous>, transform_indices = @transform_5, window_bounds = array<i64: 3, 128>}, {pipeline_mode = #tpu.pipeline_mode<synchronous>, transform_indices = @transform_6, window_bounds = array<i64: 1, 128>}, {transform_indices = @transform_7, window_bounds = array<i64: 1, 64, 128>}, {transform_indices = @transform_8, window_bounds = array<i64: 1, 1, 128>}, {transform_indices = @transform_9, window_bounds = array<i64: 1, 1, 128>}]} {
    %c0 = arith.constant 0 : index
    %c0_0 = arith.constant 0 : index
    %c0_1 = arith.constant 0 : index
    %0 = vector.load %arg2[%c0, %c0_0, %c0_1] : memref<1x64x128xf32, #tpu.memory_space<vmem>>, vector<1x64x128xf32>
    %1 = vector.shape_cast %0 : vector<1x64x128xf32> to vector<64x128xf32>
    %2 = arith.truncf %1 : vector<64x128xf32> to vector<64x128xbf16>
    %c0_2 = arith.constant 0 : index
    %c0_3 = arith.constant 0 : index
    %3 = vector.load %arg3[%c0_2, %c0_3] : memref<128x128xbf16, #tpu.memory_space<vmem>>, vector<128x128xbf16>
    %cst = arith.constant dense<0.000000e+00> : vector<64x128xf32>
    %4 = tpu.matmul %2, %3, %cst {dimension_numbers = #tpu.dot_dimension_numbers<[1], [0], [0], [1], [0, 0, 1, 1], [], []>} : vector<64x128xbf16>, vector<128x128xbf16>, vector<64x128xf32> -> vector<64x128xf32>
    %c0_4 = arith.constant 0 : index
    %c0_5 = arith.constant 0 : index
    %5 = vector.load %arg5[%c0_4, %c0_5] : memref<1x128xf32, #tpu.memory_space<vmem>>, vector<1x128xf32>
    %6 = vector.broadcast %5 : vector<1x128xf32> to vector<64x128xf32>
    %7 = arith.addf %4, %6 : vector<64x128xf32>
    %c0_6 = arith.constant 0 : index
    %c0_7 = arith.constant 0 : index
    %8 = vector.load %arg4[%c0_6, %c0_7] : memref<128x128xbf16, #tpu.memory_space<vmem>>, vector<128x128xbf16>
    %cst_8 = arith.constant dense<0.000000e+00> : vector<64x128xf32>
    %9 = tpu.matmul %2, %8, %cst_8 {dimension_numbers = #tpu.dot_dimension_numbers<[1], [0], [0], [1], [0, 0, 1, 1], [], []>} : vector<64x128xbf16>, vector<128x128xbf16>, vector<64x128xf32> -> vector<64x128xf32>
    %c0_9 = arith.constant 0 : index
    %c0_10 = arith.constant 0 : index
    %10 = vector.load %arg6[%c0_9, %c0_10] : memref<1x128xf32, #tpu.memory_space<vmem>>, vector<1x128xf32>
    %11 = vector.broadcast %10 : vector<1x128xf32> to vector<64x128xf32>
    %12 = arith.addf %9, %11 : vector<64x128xf32>
    %13 = arith.negf %12 : vector<64x128xf32>
    %14 = math.exp %13 : vector<64x128xf32>
    %cst_11 = arith.constant 1.000000e+00 : f32
    %15 = vector.broadcast %cst_11 : f32 to vector<64x128xf32>
    %16 = arith.addf %15, %14 : vector<64x128xf32>
    %17 = arith.divf %15, %16 : vector<64x128xf32>
    %18 = arith.mulf %7, %17 : vector<64x128xf32>
    %19 = arith.index_cast %arg0 : i32 to index
    %20 = memref.load %arg1[%19] : memref<2xi32, #tpu.memory_space<smem>>
    %21 = tpu.iota {dimensions = array<i32: 0>} : vector<64x1xi32>
    %22 = vector.broadcast %20 : i32 to vector<64x1xi32>
    %23 = arith.cmpi slt, %21, %22 : vector<64x1xi32>
    %24 = arith.extui %23 : vector<64x1xi1> to vector<64x1xi32>
    %25 = arith.sitofp %24 : vector<64x1xi32> to vector<64x1xf32>
    %26 = vector.broadcast %25 : vector<64x1xf32> to vector<64x128xf32>
    %27 = arith.mulf %18, %26 : vector<64x128xf32>
    %cst_12 = arith.constant 0.000000e+00 : f32
    %28 = vector.broadcast %cst_12 : f32 to vector<1x128xf32>
    %c0_13 = arith.constant 0 : index
    %c0_14 = arith.constant 0 : index
    %29 = vector.load %arg12[%c0_13, %c0_14] : memref<66x128xf32, #tpu.memory_space<vmem>>, vector<1x128xf32>
    tpu.vector_store %arg12[%c0_13, %c0_14], %28 {strides = array<i32>} : memref<66x128xf32, #tpu.memory_space<vmem>>, vector<1x128xf32>,
    %c65 = arith.constant 65 : index
    %c0_15 = arith.constant 0 : index
    %30 = vector.load %arg12[%c65, %c0_15] : memref<66x128xf32, #tpu.memory_space<vmem>>, vector<1x128xf32>
    tpu.vector_store %arg12[%c65, %c0_15], %28 {strides = array<i32>} : memref<66x128xf32, #tpu.memory_space<vmem>>, vector<1x128xf32>,
    %c1 = arith.constant 1 : index
    %c0_16 = arith.constant 0 : index
    %31 = vector.load %arg12[%c1, %c0_16] : memref<66x128xf32, #tpu.memory_space<vmem>>, vector<64x128xf32>
    tpu.vector_store %arg12[%c1, %c0_16], %27 {strides = array<i32>} : memref<66x128xf32, #tpu.memory_space<vmem>>, vector<64x128xf32>,
    %c0_17 = arith.constant 0 : index
    %c0_18 = arith.constant 0 : index
    %32 = vector.load %arg7[%c0_17, %c0_18] : memref<3x128xf32, #tpu.memory_space<vmem>>, vector<3x128xf32>
    %c0_19 = arith.constant 0 : index
    %c0_20 = arith.constant 0 : index
    %33 = vector.load %arg12[%c0_19, %c0_20] : memref<66x128xf32, #tpu.memory_space<vmem>>, vector<64x128xf32>
    %34 = vector.extract_strided_slice %32 {offsets = [0, 0], sizes = [1, 128], strides = [1, 1]} : vector<3x128xf32> to vector<1x128xf32>
    %35 = vector.shape_cast %34 : vector<1x128xf32> to vector<128xf32>
    %36 = vector.shape_cast %35 : vector<128xf32> to vector<1x128xf32>
    %37 = vector.broadcast %36 : vector<1x128xf32> to vector<64x128xf32>
    %38 = arith.mulf %33, %37 : vector<64x128xf32>
    %c1_21 = arith.constant 1 : index
    %c0_22 = arith.constant 0 : index
    %39 = vector.load %arg12[%c1_21, %c0_22] : memref<66x128xf32, #tpu.memory_space<vmem>>, vector<64x128xf32>
    %40 = vector.extract_strided_slice %32 {offsets = [1, 0], sizes = [1, 128], strides = [1, 1]} : vector<3x128xf32> to vector<1x128xf32>
    %41 = vector.shape_cast %40 : vector<1x128xf32> to vector<128xf32>
    %42 = vector.shape_cast %41 : vector<128xf32> to vector<1x128xf32>
    %43 = vector.broadcast %42 : vector<1x128xf32> to vector<64x128xf32>
    %44 = arith.mulf %39, %43 : vector<64x128xf32>
    %45 = arith.addf %38, %44 : vector<64x128xf32>
    %c2 = arith.constant 2 : index
    %c0_23 = arith.constant 0 : index
    %46 = vector.load %arg12[%c2, %c0_23] : memref<66x128xf32, #tpu.memory_space<vmem>>, vector<64x128xf32>
    %47 = vector.extract_strided_slice %32 {offsets = [2, 0], sizes = [1, 128], strides = [1, 1]} : vector<3x128xf32> to vector<1x128xf32>
    %48 = vector.shape_cast %47 : vector<1x128xf32> to vector<128xf32>
    %49 = vector.shape_cast %48 : vector<128xf32> to vector<1x128xf32>
    %50 = vector.broadcast %49 : vector<1x128xf32> to vector<64x128xf32>
    %51 = arith.mulf %46, %50 : vector<64x128xf32>
    %52 = arith.addf %45, %51 : vector<64x128xf32>
    %c0_24 = arith.constant 0 : index
    %c0_25 = arith.constant 0 : index
    %53 = vector.load %arg8[%c0_24, %c0_25] : memref<1x128xf32, #tpu.memory_space<vmem>>, vector<1x128xf32>
    %54 = vector.broadcast %53 : vector<1x128xf32> to vector<64x128xf32>
    %55 = arith.addf %52, %54 : vector<64x128xf32>
    %c0_26 = arith.constant 0 : index
    %c0_27 = arith.constant 0 : index
    %c0_28 = arith.constant 0 : index
    %56 = vector.load %arg9[%c0_26, %c0_27, %c0_28] : memref<1x64x128xf32, #tpu.memory_space<vmem>>, vector<1x64x128xf32>
    %57 = vector.shape_cast %56 : vector<1x64x128xf32> to vector<64x128xf32>
    %58 = vector.shape_cast %55 : vector<64x128xf32> to vector<1x64x128xf32>
    tpu.vector_store %arg9[%c0_26, %c0_27, %c0_28], %58 {strides = array<i32>} : memref<1x64x128xf32, #tpu.memory_space<vmem>>, vector<1x64x128xf32>,
    %cst_29 = arith.constant dense<0.000000e+00> : vector<128xf32>
    %59 = vector.multi_reduction <add>, %55, %cst_29 [0] : vector<64x128xf32> to vector<128xf32>
    %60 = vector.shape_cast %59 : vector<128xf32> to vector<1x128xf32>
    %c0_30 = arith.constant 0 : index
    %c0_31 = arith.constant 0 : index
    %c0_32 = arith.constant 0 : index
    %61 = vector.load %arg10[%c0_30, %c0_31, %c0_32] : memref<1x1x128xf32, #tpu.memory_space<vmem>>, vector<1x1x128xf32>
    %62 = vector.shape_cast %61 : vector<1x1x128xf32> to vector<1x128xf32>
    %63 = vector.shape_cast %60 : vector<1x128xf32> to vector<1x1x128xf32>
    tpu.vector_store %arg10[%c0_30, %c0_31, %c0_32], %63 {strides = array<i32>} : memref<1x1x128xf32, #tpu.memory_space<vmem>>, vector<1x1x128xf32>,
    %64 = arith.mulf %55, %55 : vector<64x128xf32>
    %cst_33 = arith.constant dense<0.000000e+00> : vector<128xf32>
    %65 = vector.multi_reduction <add>, %64, %cst_33 [0] : vector<64x128xf32> to vector<128xf32>
    %66 = vector.shape_cast %65 : vector<128xf32> to vector<1x128xf32>
    %c0_34 = arith.constant 0 : index
    %c0_35 = arith.constant 0 : index
    %c0_36 = arith.constant 0 : index
    %67 = vector.load %arg11[%c0_34, %c0_35, %c0_36] : memref<1x1x128xf32, #tpu.memory_space<vmem>>, vector<1x1x128xf32>
    %68 = vector.shape_cast %67 : vector<1x1x128xf32> to vector<1x128xf32>
    %69 = vector.shape_cast %66 : vector<1x128xf32> to vector<1x1x128xf32>
    tpu.vector_store %arg11[%c0_34, %c0_35, %c0_36], %69 {strides = array<i32>} : memref<1x1x128xf32, #tpu.memory_space<vmem>>, vector<1x1x128xf32>,
    return
  }
  func.func @transform_0(%arg0: i32, %arg1: memref<2xi32, #tpu.memory_space<smem>>) -> (i32, i32, i32) {
    %c0_i32 = arith.constant 0 : i32
    %c0_i32_0 = arith.constant 0 : i32
    %c0_i32_1 = arith.constant 0 : i32
    return %arg0, %c0_i32, %c0_i32_0 : i32, i32, i32
  }
  func.func @transform_1(%arg0: i32, %arg1: memref<2xi32, #tpu.memory_space<smem>>) -> (i32, i32) {
    %c0_i32 = arith.constant 0 : i32
    %c0_i32_0 = arith.constant 0 : i32
    %c0_i32_1 = arith.constant 0 : i32
    return %c0_i32, %c0_i32_0 : i32, i32
  }
  func.func @transform_2(%arg0: i32, %arg1: memref<2xi32, #tpu.memory_space<smem>>) -> (i32, i32) {
    %c0_i32 = arith.constant 0 : i32
    %c0_i32_0 = arith.constant 0 : i32
    %c0_i32_1 = arith.constant 0 : i32
    return %c0_i32, %c0_i32_0 : i32, i32
  }
  func.func @transform_3(%arg0: i32, %arg1: memref<2xi32, #tpu.memory_space<smem>>) -> (i32, i32) {
    %c0_i32 = arith.constant 0 : i32
    %c0_i32_0 = arith.constant 0 : i32
    %c0_i32_1 = arith.constant 0 : i32
    return %c0_i32, %c0_i32_0 : i32, i32
  }
  func.func @transform_4(%arg0: i32, %arg1: memref<2xi32, #tpu.memory_space<smem>>) -> (i32, i32) {
    %c0_i32 = arith.constant 0 : i32
    %c0_i32_0 = arith.constant 0 : i32
    %c0_i32_1 = arith.constant 0 : i32
    return %c0_i32, %c0_i32_0 : i32, i32
  }
  func.func @transform_5(%arg0: i32, %arg1: memref<2xi32, #tpu.memory_space<smem>>) -> (i32, i32) {
    %c0_i32 = arith.constant 0 : i32
    %c0_i32_0 = arith.constant 0 : i32
    %c0_i32_1 = arith.constant 0 : i32
    return %c0_i32, %c0_i32_0 : i32, i32
  }
  func.func @transform_6(%arg0: i32, %arg1: memref<2xi32, #tpu.memory_space<smem>>) -> (i32, i32) {
    %c0_i32 = arith.constant 0 : i32
    %c0_i32_0 = arith.constant 0 : i32
    %c0_i32_1 = arith.constant 0 : i32
    return %c0_i32, %c0_i32_0 : i32, i32
  }
  func.func @transform_7(%arg0: i32, %arg1: memref<2xi32, #tpu.memory_space<smem>>) -> (i32, i32, i32) {
    %c0_i32 = arith.constant 0 : i32
    %c0_i32_0 = arith.constant 0 : i32
    %c0_i32_1 = arith.constant 0 : i32
    return %arg0, %c0_i32, %c0_i32_0 : i32, i32, i32
  }
  func.func @transform_8(%arg0: i32, %arg1: memref<2xi32, #tpu.memory_space<smem>>) -> (i32, i32, i32) {
    %c0_i32 = arith.constant 0 : i32
    %c0_i32_0 = arith.constant 0 : i32
    %c0_i32_1 = arith.constant 0 : i32
    return %arg0, %c0_i32, %c0_i32_0 : i32, i32, i32
  }
  func.func @transform_9(%arg0: i32, %arg1: memref<2xi32, #tpu.memory_space<smem>>) -> (i32, i32, i32) {
    %c0_i32 = arith.constant 0 : i32
    %c0_i32_0 = arith.constant 0 : i32
    %c0_i32_1 = arith.constant 0 : i32
    return %arg0, %c0_i32, %c0_i32_0 : i32, i32, i32
  }
}

</mosaic_0001>

<llo_original>
// kernel: tpu_custom_call.1
$region0: #{tpu_custom_call.1}
  #allocation0 [shape = 'u32[]', space=smem, size = 0x4, offset = 0x4, fixed_abs, tag = 'smem constant byte address 0x4 - core index']
  #allocation1 [shape = 'u32[72,128]{1,0:T(1,128)}', space=vmem, size = 0x9000, scoped, tag = 'internal scratch']
  #allocation2 [shape = 'f32[66,128]{1,0:T(8,128)}', space=vmem, size = 0x9000, scoped, tag = 'scratch operand']
  #allocation3 [shape = 's32[1]{0}', space=sflag, size = 0x4, scoped, tag = 'scoped memory for tpu_custom_call.1']
  #allocation4 [shape = 'u8[512]{0}', space=smem, size = 0x200, scoped, tag = 'prefetched SMEM operand 0']
  %s0 = inlined_call_operand.hbm [shape: s32[2], index: 0, kind: input, shape index: {}]
  %s1 = inlined_call_operand.hbm [shape: f32[2,64,128], index: 1, kind: input, shape index: {}]
  %s2 = inlined_call_operand.hbm [shape: bf16[128,128], index: 2, kind: input, shape index: {}]
  %s3 = inlined_call_operand.hbm [shape: bf16[128,128], index: 3, kind: input, shape index: {}]
  %s4 = inlined_call_operand.vmem [shape: f32[1,128], index: 4, kind: input, shape index: {}]
  %s5 = inlined_call_operand.hbm [shape: f32[1,128], index: 5, kind: input, shape index: {}]
  %s6 = inlined_call_operand.vmem [shape: f32[3,128], index: 6, kind: input, shape index: {}]
  %s7 = inlined_call_operand.vmem [shape: f32[1,128], index: 7, kind: input, shape index: {}]
  %s8 = inlined_call_operand.hbm [shape: f32[2,64,128], index: 8, kind: output, shape index: {0}]
  %s9 = inlined_call_operand.hbm [shape: f32[2,1,128], index: 9, kind: output, shape index: {1}]
  %s10 = inlined_call_operand.hbm [shape: f32[2,1,128], index: 10, kind: output, shape index: {2}]
  %11 = xla_tuple %s8, %s9, %s10
  %s12 = sld [smem:[#allocation0]]
  $region93: #{tpu_custom_call.1} parent=0
    _
  %s14 = ssub.s32 1, %s12
  %s15 = scalar_select 0, %s14, %s12
  %s17 = sshll.u32 %s0, 4
  %s18 = int_to_ptr.hbm [resolvable:$true] %s17
  %20 = dma.hbm_to_smem %s18, 16, [#allocation4], [#allocation3]
  %22 = dma.done [#allocation3], 16
  %23 = sfence
  $region1: #{tpu_custom_call.1} parent=0
    #allocation5 [shape = 'u8[65536]{0}', space=vmem, size = 0x10000, scoped, tag = 'input window, operand 1']
    #allocation6 [shape = 's32[2]{0}', space=sflag, size = 0x8, scoped, tag = 'scoped memory for tpu_custom_call.1']
    #allocation7 [shape = 's32[2]{0}', space=sflag, size = 0x8, scoped, tag = 'scoped memory for tpu_custom_call.1']
    #allocation8 [shape = 'u8[32768]{0}', space=vmem, size = 0x8000, scoped, tag = 'input window, operand 2, single buffered']
    #allocation9 [shape = 's32[1]{0}', space=sflag, size = 0x4, scoped, tag = 'scoped memory for tpu_custom_call.1']
    #allocation10 [shape = 'u8[32768]{0}', space=vmem, size = 0x8000, scoped, tag = 'input window, operand 3, single buffered']
    #allocation11 [shape = 'u8[512]{0}', space=vmem, size = 0x400, scoped, tag = 'input window, operand 5, single buffered']
    #allocation12 [shape = 's32[1]{0}', space=sflag, size = 0x4, scoped, tag = 'scoped memory for tpu_custom_call.1']
    #allocation13 [shape = 'u8[65536]{0}', space=vmem, size = 0x10000, scoped, tag = 'output window, operand 0']
    #allocation14 [shape = 'u8[1024]{0}', space=vmem, size = 0x400, scoped, tag = 'output window, operand 1']
    #allocation15 [shape = 's32[2]{0}', space=sflag, size = 0x8, scoped, tag = 'scoped memory for tpu_custom_call.1']
    #allocation16 [shape = 'u8[1024]{0}', space=vmem, size = 0x400, scoped, tag = 'output window, operand 2']
    %24 = vsyncpa [#allocation6], 0
    %s25 = scalar_lea.sflag [#allocation6], 1
    %26 = vsyncpa %s25, 0
    %27 = vsyncpa [#allocation9], 0
    %28 = vsyncpa [#allocation12], 0
    %29 = vsyncpa [#allocation7], 0
    %s30 = scalar_lea.sflag [#allocation7], 1
    %31 = vsyncpa %s30, 0
    %32 = vsyncpa [#allocation15], 0
    %s33 = scalar_lea.sflag [#allocation15], 1
    %34 = vsyncpa %s33, 0
    loop: start=0, step=1, limit=4
    $region2: #{tpu_custom_call.1} parent=1 // loop_pre_header
      _
    $region3: #{tpu_custom_call.1} parent=1 // loop_header
      %s36 = sphi 0, %s40
      %p37 = scmp.ge.s32.totalorder %s36, 4
      %s46 = sphi 0, %s48
      %s49 = sphi 0, %s46
      %s50 = sphi 0, %s49
      %s66 = sphi 0, %s50
      %s70 = sphi 0, %s70
      %s72 = sphi 0, %s70
      %s73 = sphi 0, %s72
      %s87 = sphi 0, %s73
      %s91 = sphi 0, %s91
      %s93 = sphi 0, %s91
      %s94 = sphi 0, %s93
      %s108 = sphi 0, %s94
      %s112 = sphi 0, %s112
      %s114 = sphi 0, %s112
      %s115 = sphi 0, %s114
      %s129 = sphi 0, %s115
      %s133 = sphi 0, %s133
      %s135 = sphi 0, %s133
      %s136 = sphi 0, %s135
      %s150 = sphi 0, %s136
      %s154 = sphi 0, %s154
      %s156 = sphi 0, %s154
      %s157 = sphi 0, %s156
      %s171 = sphi 0, %s157
      %s175 = sphi 0, %s175
      %s177 = sphi 0, %s175
      %s178 = sphi 0, %s177
      %s192 = sphi 0, %s178
      %s198 = sphi 0, %s200
      %s201 = sphi 0, %s198
      %s202 = sphi 0, %s201
      %s218 = sphi 0, %s202
      %s224 = sphi 0, %s226
      %s227 = sphi 0, %s224
      %s228 = sphi 0, %s227
      %s244 = sphi 0, %s228
      %s250 = sphi 0, %s252
      %s253 = sphi 0, %s250
      %s254 = sphi 0, %s253
      %s270 = sphi 0, %s254
    $region4: #{tpu_custom_call.1} parent=1 // loop_header_branch
      %39 = sbr.rel (%p37) target = $region8
    $region5: #{tpu_custom_call.1} parent=1 // loop_body
      %s41 = ssub.s32 %s36, 1
      %s42 = ssub.s32 %s36, 2
      %s43 = sadd.s32 %s36, 1
      %s44 = ssub.s32 %s36, %s43
      %p45 = scmp.eq.s32.totalorder %s44, 0
      %s47 = sadd.s32 %s46, 1
      %s48 = scalar_select %p45, %s46, %s47
      %p51 = pneg %p45
      %p52 = scmp.eq.s32.totalorder %s36, 1
      %p53 = por %p51, %p52
      %p54 = scmp.ne.s32.totalorder %s46, %s49
      %p55 = scmp.eq.s32.totalorder %s36, 0
      %p56 = por %p54, %p55
      %p57 = scmp.ne.s32.totalorder %s46, %s49
      %p58 = scmp.eq.s32.totalorder %s41, 1
      %p59 = por %p57, %p58
      %p60 = scmp.ne.s32.totalorder %s49, %s50
      %p61 = scmp.eq.s32.totalorder %s41, 0
      %p62 = por %p60, %p61
      %p63 = scmp.ne.s32.totalorder %s49, %s50
      %p64 = scmp.eq.s32.totalorder %s42, 1
      %p65 = por %p63, %p64
      %p67 = scmp.ne.s32.totalorder %s50, %s66
      %p68 = scmp.eq.s32.totalorder %s42, 0
      %p69 = por %p67, %p68
      %s71 = sadd.s32 %s70, 1
      %p74 = scmp.eq.s32.totalorder %s36, 1
      %p75 = scmp.ne.s32.totalorder %s70, %s72
      %p76 = scmp.eq.s32.totalorder %s36, 0
      %p77 = por %p75, %p76
      %p78 = scmp.ne.s32.totalorder %s70, %s72
      %p79 = scmp.eq.s32.totalorder %s41, 1
      %p80 = por %p78, %p79
      %p81 = scmp.ne.s32.totalorder %s72, %s73
      %p82 = scmp.eq.s32.totalorder %s41, 0
      %p83 = por %p81, %p82
      %p84 = scmp.ne.s32.totalorder %s72, %s73
      %p85 = scmp.eq.s32.totalorder %s42, 1
      %p86 = por %p84, %p85
      %p88 = scmp.ne.s32.totalorder %s73, %s87
      %p89 = scmp.eq.s32.totalorder %s42, 0
      %p90 = por %p88, %p89
      %s92 = sadd.s32 %s91, 1
      %p95 = scmp.eq.s32.totalorder %s36, 1
      %p96 = scmp.ne.s32.totalorder %s91, %s93
      %p97 = scmp.eq.s32.totalorder %s36, 0
      %p98 = por %p96, %p97
      %p99 = scmp.ne.s32.totalorder %s91, %s93
      %p100 = scmp.eq.s32.totalorder %s41, 1
      %p101 = por %p99, %p100
      %p102 = scmp.ne.s32.totalorder %s93, %s94
      %p103 = scmp.eq.s32.totalorder %s41, 0
      %p104 = por %p102, %p103
      %p105 = scmp.ne.s32.totalorder %s93, %s94
      %p106 = scmp.eq.s32.totalorder %s42, 1
      %p107 = por %p105, %p106
      %p109 = scmp.ne.s32.totalorder %s94, %s108
      %p110 = scmp.eq.s32.totalorder %s42, 0
      %p111 = por %p109, %p110
      %s113 = sadd.s32 %s112, 1
      %p116 = scmp.eq.s32.totalorder %s36, 1
      %p117 = scmp.ne.s32.totalorder %s112, %s114
      %p118 = scmp.eq.s32.totalorder %s36, 0
      %p119 = por %p117, %p118
      %p120 = scmp.ne.s32.totalorder %s112, %s114
      %p121 = scmp.eq.s32.totalorder %s41, 1
      %p122 = por %p120, %p121
      %p123 = scmp.ne.s32.totalorder %s114, %s115
      %p124 = scmp.eq.s32.totalorder %s41, 0
      %p125 = por %p123, %p124
      %p126 = scmp.ne.s32.totalorder %s114, %s115
      %p127 = scmp.eq.s32.totalorder %s42, 1
      %p128 = por %p126, %p127
      %p130 = scmp.ne.s32.totalorder %s115, %s129
      %p131 = scmp.eq.s32.totalorder %s42, 0
      %p132 = por %p130, %p131
      %s134 = sadd.s32 %s133, 1
      %p137 = scmp.eq.s32.totalorder %s36, 1
      %p138 = scmp.ne.s32.totalorder %s133, %s135
      %p139 = scmp.eq.s32.totalorder %s36, 0
      %p140 = por %p138, %p139
      %p141 = scmp.ne.s32.totalorder %s133, %s135
      %p142 = scmp.eq.s32.totalorder %s41, 1
      %p143 = por %p141, %p142
      %p144 = scmp.ne.s32.totalorder %s135, %s136
      %p145 = scmp.eq.s32.totalorder %s41, 0
      %p146 = por %p144, %p145
      %p147 = scmp.ne.s32.totalorder %s135, %s136
      %p148 = scmp.eq.s32.totalorder %s42, 1
      %p149 = por %p147, %p148
      %p151 = scmp.ne.s32.totalorder %s136, %s150
      %p152 = scmp.eq.s32.totalorder %s42, 0
      %p153 = por %p151, %p152
      %s155 = sadd.s32 %s154, 1
      %p158 = scmp.eq.s32.totalorder %s36, 1
      %p159 = scmp.ne.s32.totalorder %s154, %s156
      %p160 = scmp.eq.s32.totalorder %s36, 0
      %p161 = por %p159, %p160
      %p162 = scmp.ne.s32.totalorder %s154, %s156
      %p163 = scmp.eq.s32.totalorder %s41, 1
      %p164 = por %p162, %p163
      %p165 = scmp.ne.s32.totalorder %s156, %s157
      %p166 = scmp.eq.s32.totalorder %s41, 0
      %p167 = por %p165, %p166
      %p168 = scmp.ne.s32.totalorder %s156, %s157
      %p169 = scmp.eq.s32.totalorder %s42, 1
      %p170 = por %p168, %p169
      %p172 = scmp.ne.s32.totalorder %s157, %s171
      %p173 = scmp.eq.s32.totalorder %s42, 0
      %p174 = por %p172, %p173
      %s176 = sadd.s32 %s175, 1
      %p179 = scmp.eq.s32.totalorder %s36, 1
      %p180 = scmp.ne.s32.totalorder %s175, %s177
      %p181 = scmp.eq.s32.totalorder %s36, 0
      %p182 = por %p180, %p181
      %p183 = scmp.ne.s32.totalorder %s175, %s177
      %p184 = scmp.eq.s32.totalorder %s41, 1
      %p185 = por %p183, %p184
      %p186 = scmp.ne.s32.totalorder %s177, %s178
      %p187 = scmp.eq.s32.totalorder %s41, 0
      %p188 = por %p186, %p187
      %p189 = scmp.ne.s32.totalorder %s177, %s178
      %p190 = scmp.eq.s32.totalorder %s42, 1
      %p191 = por %p189, %p190
      %p193 = scmp.ne.s32.totalorder %s178, %s192
      %p194 = scmp.eq.s32.totalorder %s42, 0
      %p195 = por %p193, %p194
      %s196 = ssub.s32 %s36, %s43
      %p197 = scmp.eq.s32.totalorder %s196, 0
      %s199 = sadd.s32 %s198, 1
      %s200 = scalar_select %p197, %s198, %s199
      %p203 = pneg %p197
      %p204 = scmp.eq.s32.totalorder %s36, 1
      %p205 = por %p203, %p204
      %p206 = scmp.ne.s32.totalorder %s198, %s201
      %p207 = scmp.eq.s32.totalorder %s36, 0
      %p208 = por %p206, %p207
      %p209 = scmp.ne.s32.totalorder %s198, %s201
      %p210 = scmp.eq.s32.totalorder %s41, 1
      %p211 = por %p209, %p210
      %p212 = scmp.ne.s32.totalorder %s201, %s202
      %p213 = scmp.eq.s32.totalorder %s41, 0
      %p214 = por %p212, %p213
      %p215 = scmp.ne.s32.totalorder %s201, %s202
      %p216 = scmp.eq.s32.totalorder %s42, 1
      %p217 = por %p215, %p216
      %p219 = scmp.ne.s32.totalorder %s202, %s218
      %p220 = scmp.eq.s32.totalorder %s42, 0
      %p221 = por %p219, %p220
      %s222 = ssub.s32 %s36, %s43
      %p223 = scmp.eq.s32.totalorder %s222, 0
      %s225 = sadd.s32 %s224, 1
      %s226 = scalar_select %p223, %s224, %s225
      %p229 = pneg %p223
      %p230 = scmp.eq.s32.totalorder %s36, 1
      %p231 = por %p229, %p230
      %p232 = scmp.ne.s32.totalorder %s224, %s227
      %p233 = scmp.eq.s32.totalorder %s36, 0
      %p234 = por %p232, %p233
      %p235 = scmp.ne.s32.totalorder %s224, %s227
      %p236 = scmp.eq.s32.totalorder %s41, 1
      %p237 = por %p235, %p236
      %p238 = scmp.ne.s32.totalorder %s227, %s228
      %p239 = scmp.eq.s32.totalorder %s41, 0
      %p240 = por %p238, %p239
      %p241 = scmp.ne.s32.totalorder %s227, %s228
      %p242 = scmp.eq.s32.totalorder %s42, 1
      %p243 = por %p241, %p242
      %p245 = scmp.ne.s32.totalorder %s228, %s244
      %p246 = scmp.eq.s32.totalorder %s42, 0
      %p247 = por %p245, %p246
      %s248 = ssub.s32 %s36, %s43
      %p249 = scmp.eq.s32.totalorder %s248, 0
      %s251 = sadd.s32 %s250, 1
      %s252 = scalar_select %p249, %s250, %s251
      %p255 = pneg %p249
      %p256 = scmp.eq.s32.totalorder %s36, 1
      %p257 = por %p255, %p256
      %p258 = scmp.ne.s32.totalorder %s250, %s253
      %p259 = scmp.eq.s32.totalorder %s36, 0
      %p260 = por %p258, %p259
      %p261 = scmp.ne.s32.totalorder %s250, %s253
      %p262 = scmp.eq.s32.totalorder %s41, 1
      %p263 = por %p261, %p262
      %p264 = scmp.ne.s32.totalorder %s253, %s254
      %p265 = scmp.eq.s32.totalorder %s41, 0
      %p266 = por %p264, %p265
      %p267 = scmp.ne.s32.totalorder %s253, %s254
      %p268 = scmp.eq.s32.totalorder %s42, 1
      %p269 = por %p267, %p268
      %p271 = scmp.ne.s32.totalorder %s254, %s270
      %p272 = scmp.eq.s32.totalorder %s42, 0
      %p273 = por %p271, %p272
      %p274 = scmp.le.s32.totalorder 1, %s36
      %p275 = scmp.lt.s32.totalorder %s36, 3
      %p276 = pnand %p274, %p275
      %p277 = pneg %p276
      // Predicated region
      $region9: #{tpu_custom_call.1} parent=5 // pred_check
        _
      $region10: #{tpu_custom_call.1} parent=5 // pred_check_branch
        %279 = sbr.rel (%p276) target = $region12
      $region11: #{tpu_custom_call.1} parent=5 // pred_region
        %s280 = ssub.s32 %s36, 1
        // Predicated region
        $region13: #{tpu_custom_call.1} parent=11 // pred_check
          %p281 = pneg %p83
        $region14: #{tpu_custom_call.1} parent=11 // pred_check_branch
          %283 = sbr.rel (%p281) target = $region16
        $region15: #{tpu_custom_call.1} parent=11 // pred_region
          %285 = vsyncadd [#allocation9], 0
          %s286 = sshll.u32 %s2, 4
          %s287 = int_to_ptr.hbm [resolvable:$true] %s286
          %s288 = sshll.u32 [#allocation8], 4
          %s289 = int_to_ptr.vmem [resolvable:$true] %s288
          %294 = dma.hbm_to_vmem [thread:$0]  %s287, 1024, %s289, [#allocation9], 64, 64, 4
        $region16: #{tpu_custom_call.1} parent=11 // pred_fallthru
          _
        // Predicated region
        $region17: #{tpu_custom_call.1} parent=11 // pred_check
          %p295 = pneg %p104
        $region18: #{tpu_custom_call.1} parent=11 // pred_check_branch
          %297 = sbr.rel (%p295) target = $region20
        $region19: #{tpu_custom_call.1} parent=11 // pred_region
          %299 = vsyncadd [#allocation9], 0
          %s300 = sshll.u32 %s3, 4
          %s301 = int_to_ptr.hbm [resolvable:$true] %s300
          %s302 = sshll.u32 [#allocation10], 4
          %s303 = int_to_ptr.vmem [resolvable:$true] %s302
          %308 = dma.hbm_to_vmem [thread:$0]  %s301, 1024, %s303, [#allocation9], 64, 64, 4
        $region20: #{tpu_custom_call.1} parent=11 // pred_fallthru
          _
        // Predicated region
        $region21: #{tpu_custom_call.1} parent=11 // pred_check
          %p309 = pneg %p125
        $region22: #{tpu_custom_call.1} parent=11 // pred_check_branch
          %311 = sbr.rel (%p309) target = $region24
        $region23: #{tpu_custom_call.1} parent=11 // pred_region
          _
        $region24: #{tpu_custom_call.1} parent=11 // pred_fallthru
          _
        // Predicated region
        $region25: #{tpu_custom_call.1} parent=11 // pred_check
          %p312 = pneg %p146
        $region26: #{tpu_custom_call.1} parent=11 // pred_check_branch
          %314 = sbr.rel (%p312) target = $region28
        $region27: #{tpu_custom_call.1} parent=11 // pred_region
          %316 = vsyncadd [#allocation12], 0
          %s318 = sshll.u32 %s5, 4
          %s319 = int_to_ptr.hbm [resolvable:$true] %s318
          %s320 = sshll.u32 [#allocation11], 4
          %s321 = int_to_ptr.vmem [resolvable:$true] %s320
          %323 = dma.hbm_to_vmem [thread:$0]  %s319, 16, %s321, [#allocation12]
        $region28: #{tpu_custom_call.1} parent=11 // pred_fallthru
          _
        // Predicated region
        $region29: #{tpu_custom_call.1} parent=11 // pred_check
          %p324 = pneg %p167
        $region30: #{tpu_custom_call.1} parent=11 // pred_check_branch
          %326 = sbr.rel (%p324) target = $region32
        $region31: #{tpu_custom_call.1} parent=11 // pred_region
          _
        $region32: #{tpu_custom_call.1} parent=11 // pred_fallthru
          _
        // Predicated region
        $region33: #{tpu_custom_call.1} parent=11 // pred_check
          %p327 = pneg %p188
        $region34: #{tpu_custom_call.1} parent=11 // pred_check_branch
          %329 = sbr.rel (%p327) target = $region36
        $region35: #{tpu_custom_call.1} parent=11 // pred_region
          _
        $region36: #{tpu_custom_call.1} parent=11 // pred_fallthru
          _
      $region12: #{tpu_custom_call.1} parent=5 // pred_fallthru
        _
      %p330 = scmp.lt.s32.totalorder %s36, 2
      // Predicated region
      $region37: #{tpu_custom_call.1} parent=5 // pred_check
        %p331 = pneg %p330
      $region38: #{tpu_custom_call.1} parent=5 // pred_check_branch
        %333 = sbr.rel (%p331) target = $region40
      $region39: #{tpu_custom_call.1} parent=5 // pred_region
        // Predicated region
        $region41: #{tpu_custom_call.1} parent=39 // pred_check
          %p334 = pneg %p56
        $region42: #{tpu_custom_call.1} parent=39 // pred_check_branch
          %336 = sbr.rel (%p334) target = $region44
        $region43: #{tpu_custom_call.1} parent=39 // pred_region
          %s337 = sand.u32 %s46, 1
          %s338 = scalar_lea.sflag [#allocation6], %s337
          %s339 = sand.u32 %s46, 1
          %s340 = smul.addr %s339, 64
          %s341 = scalar_lea.vmem [#allocation5], %s340
          %343 = vsyncadd %s338, 0
          %s344 = smul.addr %s36, 8
          %s345 = smul.addr %s344, 8
          %s346 = scalar_lea.hbm %s1, %s345
          %s347 = sshll.u32 %s346, 4
          %s348 = int_to_ptr.hbm [resolvable:$true] %s347
          %s349 = sshll.u32 %s341, 4
          %s350 = int_to_ptr.vmem [resolvable:$true] %s349
          %355 = dma.hbm_to_vmem [thread:$0]  %s348, 1024, %s350, %s338, 128, 128, 8
        $region44: #{tpu_custom_call.1} parent=39 // pred_fallthru
          _
      $region40: #{tpu_custom_call.1} parent=5 // pred_fallthru
        _
      %p356 = scmp.le.s32.totalorder 1, %s36
      %p357 = scmp.lt.s32.totalorder %s36, 3
      %p358 = pnand %p356, %p357
      %p359 = pneg %p358
      // Predicated region
      $region45: #{tpu_custom_call.1} parent=5 // pred_check
        _
      $region46: #{tpu_custom_call.1} parent=5 // pred_check_branch
        %361 = sbr.rel (%p358) target = $region48
      $region47: #{tpu_custom_call.1} parent=5 // pred_region
        %s362 = ssub.s32 %s36, 1
        %s363 = sand.u32 %s49, 1
        %s364 = scalar_lea.sflag [#allocation6], %s363
        %s365 = sand.u32 %s49, 1
        %s366 = smul.addr %s365, 64
        %s367 = scalar_lea.vmem [#allocation5], %s366
        // Predicated region
        $region49: #{tpu_custom_call.1} parent=47 // pred_check
          %p368 = pneg %p62
        $region50: #{tpu_custom_call.1} parent=47 // pred_check_branch
          %370 = sbr.rel (%p368) target = $region52
        $region51: #{tpu_custom_call.1} parent=47 // pred_region
          %372 = dma.done %s364, 1024
        $region52: #{tpu_custom_call.1} parent=47 // pred_fallthru
          _
        // Predicated region
        $region53: #{tpu_custom_call.1} parent=47 // pred_check
          %p373 = pneg %p83
        $region54: #{tpu_custom_call.1} parent=47 // pred_check_branch
          %375 = sbr.rel (%p373) target = $region56
        $region55: #{tpu_custom_call.1} parent=47 // pred_region
          %377 = dma.done [#allocation9], 1024
        $region56: #{tpu_custom_call.1} parent=47 // pred_fallthru
          _
        // Predicated region
        $region57: #{tpu_custom_call.1} parent=47 // pred_check
          %p378 = pneg %p104
        $region58: #{tpu_custom_call.1} parent=47 // pred_check_branch
          %380 = sbr.rel (%p378) target = $region60
        $region59: #{tpu_custom_call.1} parent=47 // pred_region
          %382 = dma.done [#allocation9], 1024
        $region60: #{tpu_custom_call.1} parent=47 // pred_fallthru
          _
        // Predicated region
        $region61: #{tpu_custom_call.1} parent=47 // pred_check
          %p383 = pneg %p146
        $region62: #{tpu_custom_call.1} parent=47 // pred_check_branch
          %385 = sbr.rel (%p383) target = $region64
        $region63: #{tpu_custom_call.1} parent=47 // pred_region
          %387 = dma.done [#allocation12], 16
        $region64: #{tpu_custom_call.1} parent=47 // pred_fallthru
          _
        %s388 = sand.u32 %s49, 1
        %s389 = scalar_lea.sflag [#allocation6], %s388
        %s390 = sand.u32 %s49, 1
        %s391 = smul.addr %s390, 64
        %s392 = scalar_lea.vmem [#allocation5], %s391
        %p393 = pneg %p62
        %p394 = pneg %p59
        %p395 = pneg %p83
        %p396 = pneg %p80
        %p397 = pneg %p104
        %p398 = pneg %p101
        %p399 = pneg %p125
        %p400 = pneg %p122
        %p401 = pneg %p146
        %p402 = pneg %p143
        %p403 = pneg %p167
        %p404 = pneg %p164
        %p405 = pneg %p188
        %p406 = pneg %p185
        %p407 = pneg %p214
        %p408 = pneg %p211
        %s409 = sand.u32 %s201, 1
        %s410 = scalar_lea.sflag [#allocation7], %s409
        %s411 = sand.u32 %s201, 1
        %s412 = smul.addr %s411, 64
        %s413 = scalar_lea.vmem [#allocation13], %s412
        %p414 = pneg %p240
        %p415 = pneg %p237
        %s416 = sand.u32 %s41, 1
        %s417 = scalar_lea.sflag [#allocation15], %s416
        %s418 = sand.u32 %s227, 1
        %s419 = scalar_lea.vmem [#allocation14], %s418
        %p420 = pneg %p266
        %p421 = pneg %p263
        %s422 = sand.u32 %s41, 1
        %s423 = scalar_lea.sflag [#allocation15], %s422
        %s424 = sand.u32 %s253, 1
        %s425 = scalar_lea.vmem [#allocation16], %s424
        %v426 = vld [vmem:[%s367] sm:$0xff]
        %v427 = vld [vmem:[%s367 + $0x8] sm:$0xff]
        %v428 = vld [vmem:[%s367 + $0x10] sm:$0xff]
        %v429 = vld [vmem:[%s367 + $0x18] sm:$0xff]
        %v430 = vld [vmem:[%s367 + $0x20] sm:$0xff]
        %v431 = vld [vmem:[%s367 + $0x28] sm:$0xff]
        %v432 = vld [vmem:[%s367 + $0x30] sm:$0xff]
        %v433 = vld [vmem:[%s367 + $0x38] sm:$0xff]
        %v434 = vpack.c.bf16 %v427, %v426
        %v435 = vpack.c.bf16 %v429, %v428
        %v436 = vpack.c.bf16 %v431, %v430
        %v437 = vpack.c.bf16 %v433, %v432
        %v438 = vld [vmem:[#allocation8] sm:$0xf]
        %v439 = vld [vmem:[#allocation8 + $0x4] sm:$0xf]
        %v440 = vld [vmem:[#allocation8 + $0x8] sm:$0xf]
        %v441 = vld [vmem:[#allocation8 + $0xc] sm:$0xf]
        %v442 = vld [vmem:[#allocation8 + $0x10] sm:$0xf]
        %v443 = vld [vmem:[#allocation8 + $0x14] sm:$0xf]
        %v444 = vld [vmem:[#allocation8 + $0x18] sm:$0xf]
        %v445 = vld [vmem:[#allocation8 + $0x1c] sm:$0xf]
        %v446 = vld [vmem:[#allocation8 + $0x20] sm:$0xf]
        %v447 = vld [vmem:[#allocation8 + $0x24] sm:$0xf]
        %v448 = vld [vmem:[#allocation8 + $0x28] sm:$0xf]
        %v449 = vld [vmem:[#allocation8 + $0x2c] sm:$0xf]
        %v450 = vld [vmem:[#allocation8 + $0x30] sm:$0xf]
        %v451 = vld [vmem:[#allocation8 + $0x34] sm:$0xf]
        %v452 = vld [vmem:[#allocation8 + $0x38] sm:$0xf]
        %v453 = vld [vmem:[#allocation8 + $0x3c] sm:$0xf]
        %v454 = vld [vmem:[%s4] sm:$0x1]
        %v456 = vperm.slane %v454, 0
        %v474 = vunpack.c.l.b16 %v438
        %v475 = vunpack.c.l.b16 %v439
        %v476 = vunpack.c.l.b16 %v440
        %v477 = vunpack.c.l.b16 %v441
        %v478 = vunpack.c.l.b16 %v442
        %v479 = vunpack.c.l.b16 %v443
        %v480 = vunpack.c.l.b16 %v444
        %v481 = vunpack.c.l.b16 %v445
        %v482 = vunpack.c.l.b16 %v446
        %v483 = vunpack.c.l.b16 %v447
        %v484 = vunpack.c.l.b16 %v448
        %v485 = vunpack.c.l.b16 %v449
        %v486 = vunpack.c.l.b16 %v450
        %v487 = vunpack.c.l.b16 %v451
        %v488 = vunpack.c.l.b16 %v452
        %v489 = vunpack.c.l.b16 %v453
        %v490 = vpack.c.b16 %v475, %v474
        %v491 = vpack.c.b16 %v477, %v476
        %v492 = vpack.c.b16 %v479, %v478
        %v493 = vpack.c.b16 %v481, %v480
        %v494 = vpack.c.b16 %v483, %v482
        %v495 = vpack.c.b16 %v485, %v484
        %v496 = vpack.c.b16 %v487, %v486
        %v497 = vpack.c.b16 %v489, %v488
        %506 = vmatpush.bf16.msra.mxu0 %v497
        %507 = vmatpush.bf16.msra.mxu0 %v496
        %508 = vmatpush.bf16.msra.mxu0 %v495
        %509 = vmatpush.bf16.msra.mxu0 %v494
        %510 = vmatpush.bf16.msra.mxu0 %v493
        %511 = vmatpush.bf16.msra.mxu0 %v492
        %512 = vmatpush.bf16.msra.mxu0 %v491
        %513 = vmatpush.bf16.msra.mxu0 %v490
        %514 = vmatmul.bf16.gmra.mxu0 %v434
        %v515 = vpop.f32.mrf.mxu0
        %v516 = vadd.f32 %v456, %v515
        %v517 = vpop.f32.mrf.mxu0
        %v518 = vadd.f32 %v456, %v517
        %519 = vmatmul.bf16.gmra.mxu0 %v435
        %v520 = vpop.f32.mrf.mxu0
        %v521 = vadd.f32 %v456, %v520
        %v522 = vpop.f32.mrf.mxu0
        %v523 = vadd.f32 %v456, %v522
        %524 = vmatmul.bf16.gmra.mxu0 %v436
        %v525 = vpop.f32.mrf.mxu0
        %v526 = vadd.f32 %v456, %v525
        %v527 = vpop.f32.mrf.mxu0
        %v528 = vadd.f32 %v456, %v527
        %529 = vmatmul.bf16.gmra.mxu0 %v437
        %v530 = vpop.f32.mrf.mxu0
        %v531 = vadd.f32 %v456, %v530
        %v532 = vpop.f32.mrf.mxu0
        %v533 = vadd.f32 %v456, %v532
        %534 = vdwg.mxu0
        %v535 = vld [vmem:[#allocation10] sm:$0xf]
        %v536 = vld [vmem:[#allocation10 + $0x4] sm:$0xf]
        %v537 = vld [vmem:[#allocation10 + $0x8] sm:$0xf]
        %v538 = vld [vmem:[#allocation10 + $0xc] sm:$0xf]
        %v539 = vld [vmem:[#allocation10 + $0x10] sm:$0xf]
        %v540 = vld [vmem:[#allocation10 + $0x14] sm:$0xf]
        %v541 = vld [vmem:[#allocation10 + $0x18] sm:$0xf]
        %v542 = vld [vmem:[#allocation10 + $0x1c] sm:$0xf]
        %v543 = vld [vmem:[#allocation10 + $0x20] sm:$0xf]
        %v544 = vld [vmem:[#allocation10 + $0x24] sm:$0xf]
        %v545 = vld [vmem:[#allocation10 + $0x28] sm:$0xf]
        %v546 = vld [vmem:[#allocation10 + $0x2c] sm:$0xf]
        %v547 = vld [vmem:[#allocation10 + $0x30] sm:$0xf]
        %v548 = vld [vmem:[#allocation10 + $0x34] sm:$0xf]
        %v549 = vld [vmem:[#allocation10 + $0x38] sm:$0xf]
        %v550 = vld [vmem:[#allocation10 + $0x3c] sm:$0xf]
        %v551 = vld [vmem:[#allocation11] sm:$0x1]
        %v553 = vperm.slane %v551, 0
        %v571 = vunpack.c.l.b16 %v535
        %v572 = vunpack.c.l.b16 %v536
        %v573 = vunpack.c.l.b16 %v537
        %v574 = vunpack.c.l.b16 %v538
        %v575 = vunpack.c.l.b16 %v539
        %v576 = vunpack.c.l.b16 %v540
        %v577 = vunpack.c.l.b16 %v541
        %v578 = vunpack.c.l.b16 %v542
        %v579 = vunpack.c.l.b16 %v543
        %v580 = vunpack.c.l.b16 %v544
        %v581 = vunpack.c.l.b16 %v545
        %v582 = vunpack.c.l.b16 %v546
        %v583 = vunpack.c.l.b16 %v547
        %v584 = vunpack.c.l.b16 %v548
        %v585 = vunpack.c.l.b16 %v549
        %v586 = vunpack.c.l.b16 %v550
        %v587 = vpack.c.b16 %v572, %v571
        %v588 = vpack.c.b16 %v574, %v573
        %v589 = vpack.c.b16 %v576, %v575
        %v590 = vpack.c.b16 %v578, %v577
        %v591 = vpack.c.b16 %v580, %v579
        %v592 = vpack.c.b16 %v582, %v581
        %v593 = vpack.c.b16 %v584, %v583
        %v594 = vpack.c.b16 %v586, %v585
        %603 = vmatpush.bf16.msra.mxu0 %v594
        %604 = vmatpush.bf16.msra.mxu0 %v593
        %605 = vmatpush.bf16.msra.mxu0 %v592
        %606 = vmatpush.bf16.msra.mxu0 %v591
        %607 = vmatpush.bf16.msra.mxu0 %v590
        %608 = vmatpush.bf16.msra.mxu0 %v589
        %609 = vmatpush.bf16.msra.mxu0 %v588
        %610 = vmatpush.bf16.msra.mxu0 %v587
        %611 = vmatmul.bf16.gmra.mxu0 %v434
        %v612 = vpop.f32.mrf.mxu0
        %v613 = vadd.f32 %v553, %v612
        %v614 = vpop.f32.mrf.mxu0
        %v615 = vadd.f32 %v553, %v614
        %616 = vmatmul.bf16.gmra.mxu0 %v435
        %v617 = vpop.f32.mrf.mxu0
        %v618 = vadd.f32 %v553, %v617
        %v619 = vpop.f32.mrf.mxu0
        %v620 = vadd.f32 %v553, %v619
        %621 = vmatmul.bf16.gmra.mxu0 %v436
        %v622 = vpop.f32.mrf.mxu0
        %v623 = vadd.f32 %v553, %v622
        %v624 = vpop.f32.mrf.mxu0
        %v625 = vadd.f32 %v553, %v624
        %626 = vmatmul.bf16.gmra.mxu0 %v437
        %v627 = vpop.f32.mrf.mxu0
        %v628 = vadd.f32 %v553, %v627
        %v629 = vpop.f32.mrf.mxu0
        %v630 = vadd.f32 %v553, %v629
        %631 = vdwg.mxu0
        %v632 = vxor.u32 %v613, 2147483648
        %v633 = vxor.u32 %v615, 2147483648
        %v634 = vxor.u32 %v618, 2147483648
        %v635 = vxor.u32 %v620, 2147483648
        %v636 = vxor.u32 %v623, 2147483648
        %v637 = vxor.u32 %v625, 2147483648
        %v638 = vxor.u32 %v628, 2147483648
        %v639 = vxor.u32 %v630, 2147483648
        %v640 = vmul.f32 %v632, 1.442695
        %v641 = vpow.pop %v640
        %v642 = vmul.f32 %v633, 1.442695
        %v643 = vpow.pop %v642
        %v644 = vmul.f32 %v634, 1.442695
        %v645 = vpow.pop %v644
        %v646 = vmul.f32 %v635, 1.442695
        %v647 = vpow.pop %v646
        %v648 = vmul.f32 %v636, 1.442695
        %v649 = vpow.pop %v648
        %v650 = vmul.f32 %v637, 1.442695
        %v651 = vpow.pop %v650
        %v652 = vmul.f32 %v638, 1.442695
        %v653 = vpow.pop %v652
        %v654 = vmul.f32 %v639, 1.442695
        %v655 = vpow.pop %v654
        %v656 = vadd.f32 %v641, 1.0
        %v657 = vadd.f32 %v643, 1.0
        %v658 = vadd.f32 %v645, 1.0
        %v659 = vadd.f32 %v647, 1.0
        %v660 = vadd.f32 %v649, 1.0
        %v661 = vadd.f32 %v651, 1.0
        %v662 = vadd.f32 %v653, 1.0
        %v663 = vadd.f32 %v655, 1.0
        %v664 = vrcp.pop %v656
        %v665 = vmul.f32 %v656, %v664
        %v666 = vsub.f32 1.0, %v665
        %v667 = vmul.f32 %v664, %v666
        %v668 = vadd.f32 %v664, %v667
        %vm669 = vweird.f32 %v656
        %vm670 = vweird.f32 %v664
        %vm671 = vmor %vm669, %vm670
        %v672 = vsel %vm671, %v664, %v668
        %v673 = vand.u32 2147483647, %v656
        %vm674 = vcmp.eq.f32.partialorder %v673, 8.507059e+37
        %v675 = vand.u32 %v656, 2147483648
        %v676 = vor.u32 1.1754944e-38, %v675
        %v677 = vsel %vm674, %v676, %v672
        %v678 = vmul.f32 1.0, %v677
        %v679 = vrcp.pop %v657
        %v680 = vmul.f32 %v657, %v679
        %v681 = vsub.f32 1.0, %v680
        %v682 = vmul.f32 %v679, %v681
        %v683 = vadd.f32 %v679, %v682
        %vm684 = vweird.f32 %v657
        %vm685 = vweird.f32 %v679
        %vm686 = vmor %vm684, %vm685
        %v687 = vsel %vm686, %v679, %v683
        %v688 = vand.u32 2147483647, %v657
        %vm689 = vcmp.eq.f32.partialorder %v688, 8.507059e+37
        %v690 = vand.u32 %v657, 2147483648
        %v691 = vor.u32 1.1754944e-38, %v690
        %v692 = vsel %vm689, %v691, %v687
        %v693 = vmul.f32 1.0, %v692
        %v694 = vrcp.pop %v658
        %v695 = vmul.f32 %v658, %v694
        %v696 = vsub.f32 1.0, %v695
        %v697 = vmul.f32 %v694, %v696
        %v698 = vadd.f32 %v694, %v697
        %vm699 = vweird.f32 %v658
        %vm700 = vweird.f32 %v694
        %vm701 = vmor %vm699, %vm700
        %v702 = vsel %vm701, %v694, %v698
        %v703 = vand.u32 2147483647, %v658
        %vm704 = vcmp.eq.f32.partialorder %v703, 8.507059e+37
        %v705 = vand.u32 %v658, 2147483648
        %v706 = vor.u32 1.1754944e-38, %v705
        %v707 = vsel %vm704, %v706, %v702
        %v708 = vmul.f32 1.0, %v707
        %v709 = vrcp.pop %v659
        %v710 = vmul.f32 %v659, %v709
        %v711 = vsub.f32 1.0, %v710
        %v712 = vmul.f32 %v709, %v711
        %v713 = vadd.f32 %v709, %v712
        %vm714 = vweird.f32 %v659
        %vm715 = vweird.f32 %v709
        %vm716 = vmor %vm714, %vm715
        %v717 = vsel %vm716, %v709, %v713
        %v718 = vand.u32 2147483647, %v659
        %vm719 = vcmp.eq.f32.partialorder %v718, 8.507059e+37
        %v720 = vand.u32 %v659, 2147483648
        %v721 = vor.u32 1.1754944e-38, %v720
        %v722 = vsel %vm719, %v721, %v717
        %v723 = vmul.f32 1.0, %v722
        %v724 = vrcp.pop %v660
        %v725 = vmul.f32 %v660, %v724
        %v726 = vsub.f32 1.0, %v725
        %v727 = vmul.f32 %v724, %v726
        %v728 = vadd.f32 %v724, %v727
        %vm729 = vweird.f32 %v660
        %vm730 = vweird.f32 %v724
        %vm731 = vmor %vm729, %vm730
        %v732 = vsel %vm731, %v724, %v728
        %v733 = vand.u32 2147483647, %v660
        %vm734 = vcmp.eq.f32.partialorder %v733, 8.507059e+37
        %v735 = vand.u32 %v660, 2147483648
        %v736 = vor.u32 1.1754944e-38, %v735
        %v737 = vsel %vm734, %v736, %v732
        %v738 = vmul.f32 1.0, %v737
        %v739 = vrcp.pop %v661
        %v740 = vmul.f32 %v661, %v739
        %v741 = vsub.f32 1.0, %v740
        %v742 = vmul.f32 %v739, %v741
        %v743 = vadd.f32 %v739, %v742
        %vm744 = vweird.f32 %v661
        %vm745 = vweird.f32 %v739
        %vm746 = vmor %vm744, %vm745
        %v747 = vsel %vm746, %v739, %v743
        %v748 = vand.u32 2147483647, %v661
        %vm749 = vcmp.eq.f32.partialorder %v748, 8.507059e+37
        %v750 = vand.u32 %v661, 2147483648
        %v751 = vor.u32 1.1754944e-38, %v750
        %v752 = vsel %vm749, %v751, %v747
        %v753 = vmul.f32 1.0, %v752
        %v754 = vrcp.pop %v662
        %v755 = vmul.f32 %v662, %v754
        %v756 = vsub.f32 1.0, %v755
        %v757 = vmul.f32 %v754, %v756
        %v758 = vadd.f32 %v754, %v757
        %vm759 = vweird.f32 %v662
        %vm760 = vweird.f32 %v754
        %vm761 = vmor %vm759, %vm760
        %v762 = vsel %vm761, %v754, %v758
        %v763 = vand.u32 2147483647, %v662
        %vm764 = vcmp.eq.f32.partialorder %v763, 8.507059e+37
        %v765 = vand.u32 %v662, 2147483648
        %v766 = vor.u32 1.1754944e-38, %v765
        %v767 = vsel %vm764, %v766, %v762
        %v768 = vmul.f32 1.0, %v767
        %v769 = vrcp.pop %v663
        %v770 = vmul.f32 %v663, %v769
        %v771 = vsub.f32 1.0, %v770
        %v772 = vmul.f32 %v769, %v771
        %v773 = vadd.f32 %v769, %v772
        %vm774 = vweird.f32 %v663
        %vm775 = vweird.f32 %v769
        %vm776 = vmor %vm774, %vm775
        %v777 = vsel %vm776, %v769, %v773
        %v778 = vand.u32 2147483647, %v663
        %vm779 = vcmp.eq.f32.partialorder %v778, 8.507059e+37
        %v780 = vand.u32 %v663, 2147483648
        %v781 = vor.u32 1.1754944e-38, %v780
        %v782 = vsel %vm779, %v781, %v777
        %v783 = vmul.f32 1.0, %v782
        %v784 = vmul.f32 %v516, %v678
        %v785 = vmul.f32 %v518, %v693
        %v786 = vmul.f32 %v521, %v708
        %v787 = vmul.f32 %v523, %v723
        %v788 = vmul.f32 %v526, %v738
        %v789 = vmul.f32 %v528, %v753
        %v790 = vmul.f32 %v531, %v768
        %v791 = vmul.f32 %v533, %v783
        %s792 = sld [smem:[#allocation4 + %s41]]
        %v793 = vlaneseq
        %v794 = vshrl.u32 %v793, 7
        %v795 = vadd.s32 %v794, 8
        %v796 = vadd.s32 %v794, 16
        %v797 = vadd.s32 %v794, 24
        %v798 = vadd.s32 %v794, 32
        %v799 = vadd.s32 %v794, 40
        %v800 = vadd.s32 %v794, 48
        %v801 = vadd.s32 %v794, 56
        %v802 = vstv %s792
        %vm803 = vcmp.lt.s32.totalorder %v794, %v802
        %vm804 = vcmp.lt.s32.totalorder %v795, %v802
        %vm805 = vcmp.lt.s32.totalorder %v796, %v802
        %vm806 = vcmp.lt.s32.totalorder %v797, %v802
        %vm807 = vcmp.lt.s32.totalorder %v798, %v802
        %vm808 = vcmp.lt.s32.totalorder %v799, %v802
        %vm809 = vcmp.lt.s32.totalorder %v800, %v802
        %vm810 = vcmp.lt.s32.totalorder %v801, %v802
        %v811 = vsel %vm803, 1, 0
        %v812 = vsel %vm804, 1, 0
        %v813 = vsel %vm805, 1, 0
        %v814 = vsel %vm806, 1, 0
        %v815 = vsel %vm807, 1, 0
        %v816 = vsel %vm808, 1, 0
        %v817 = vsel %vm809, 1, 0
        %v818 = vsel %vm810, 1, 0
        %v819 = vcvt.s32.f32 %v811
        %v820 = vcvt.s32.f32 %v812
        %v821 = vcvt.s32.f32 %v813
        %v822 = vcvt.s32.f32 %v814
        %v823 = vcvt.s32.f32 %v815
        %v824 = vcvt.s32.f32 %v816
        %v825 = vcvt.s32.f32 %v817
        %v826 = vcvt.s32.f32 %v818
        %v827 = vmul.f32 %v784, %v819
        %v828 = vmul.f32 %v785, %v820
        %v829 = vmul.f32 %v786, %v821
        %v830 = vmul.f32 %v787, %v822
        %v831 = vmul.f32 %v788, %v823
        %v832 = vmul.f32 %v789, %v824
        %v833 = vmul.f32 %v790, %v825
        %v834 = vmul.f32 %v791, %v826
        %835 = vst [vmem:[#allocation2] sm:$0x1] 0.0
        %836 = vst [vmem:[#allocation2 + $0x41] sm:$0x1] 0.0
        %837 = vst [vmem:[#allocation2 + $0x1] sm:$0xff] %v827
        %838 = vst [vmem:[#allocation2 + $0x9] sm:$0xff] %v828
        %839 = vst [vmem:[#allocation2 + $0x11] sm:$0xff] %v829
        %840 = vst [vmem:[#allocation2 + $0x19] sm:$0xff] %v830
        %841 = vst [vmem:[#allocation2 + $0x21] sm:$0xff] %v831
        %842 = vst [vmem:[#allocation2 + $0x29] sm:$0xff] %v832
        %843 = vst [vmem:[#allocation2 + $0x31] sm:$0xff] %v833
        %844 = vst [vmem:[#allocation2 + $0x39] sm:$0xff] %v834
        %v845 = vld [vmem:[%s6] sm:$0x7]
        %v846 = vld [vmem:[#allocation2] sm:$0xff]
        %v847 = vld [vmem:[#allocation2 + $0x8] sm:$0xff]
        %v848 = vld [vmem:[#allocation2 + $0x10] sm:$0xff]
        %v849 = vld [vmem:[#allocation2 + $0x18] sm:$0xff]
        %v850 = vld [vmem:[#allocation2 + $0x20] sm:$0xff]
        %v851 = vld [vmem:[#allocation2 + $0x28] sm:$0xff]
        %v852 = vld [vmem:[#allocation2 + $0x30] sm:$0xff]
        %v853 = vld [vmem:[#allocation2 + $0x38] sm:$0xff]
        %v854 = vperm.slane %v845, 0
        %v855 = vmul.f32 %v846, %v854
        %v856 = vmul.f32 %v847, %v854
        %v857 = vmul.f32 %v848, %v854
        %v858 = vmul.f32 %v849, %v854
        %v859 = vmul.f32 %v850, %v854
        %v860 = vmul.f32 %v851, %v854
        %v861 = vmul.f32 %v852, %v854
        %v862 = vmul.f32 %v853, %v854
        %v863 = vld [vmem:[#allocation2 + $0x1] sm:$0xff]
        %v864 = vld [vmem:[#allocation2 + $0x9] sm:$0xff]
        %v865 = vld [vmem:[#allocation2 + $0x11] sm:$0xff]
        %v866 = vld [vmem:[#allocation2 + $0x19] sm:$0xff]
        %v867 = vld [vmem:[#allocation2 + $0x21] sm:$0xff]
        %v868 = vld [vmem:[#allocation2 + $0x29] sm:$0xff]
        %v869 = vld [vmem:[#allocation2 + $0x31] sm:$0xff]
        %v870 = vld [vmem:[#allocation2 + $0x39] sm:$0xff]
        %v871 = vperm.slane %v845, 1
        %v872 = vmul.f32 %v863, %v871
        %v873 = vmul.f32 %v864, %v871
        %v874 = vmul.f32 %v865, %v871
        %v875 = vmul.f32 %v866, %v871
        %v876 = vmul.f32 %v867, %v871
        %v877 = vmul.f32 %v868, %v871
        %v878 = vmul.f32 %v869, %v871
        %v879 = vmul.f32 %v870, %v871
        %v880 = vadd.f32 %v855, %v872
        %v881 = vadd.f32 %v856, %v873
        %v882 = vadd.f32 %v857, %v874
        %v883 = vadd.f32 %v858, %v875
        %v884 = vadd.f32 %v859, %v876
        %v885 = vadd.f32 %v860, %v877
        %v886 = vadd.f32 %v861, %v878
        %v887 = vadd.f32 %v862, %v879
        %v888 = vld [vmem:[#allocation2 + $0x2] sm:$0xff]
        %v889 = vld [vmem:[#allocation2 + $0xa] sm:$0xff]
        %v890 = vld [vmem:[#allocation2 + $0x12] sm:$0xff]
        %v891 = vld [vmem:[#allocation2 + $0x1a] sm:$0xff]
        %v892 = vld [vmem:[#allocation2 + $0x22] sm:$0xff]
        %v893 = vld [vmem:[#allocation2 + $0x2a] sm:$0xff]
        %v894 = vld [vmem:[#allocation2 + $0x32] sm:$0xff]
        %v895 = vld [vmem:[#allocation2 + $0x3a] sm:$0xff]
        %v896 = vperm.slane %v845, 2
        %v897 = vmul.f32 %v888, %v896
        %v898 = vmul.f32 %v889, %v896
        %v899 = vmul.f32 %v890, %v896
        %v900 = vmul.f32 %v891, %v896
        %v901 = vmul.f32 %v892, %v896
        %v902 = vmul.f32 %v893, %v896
        %v903 = vmul.f32 %v894, %v896
        %v904 = vmul.f32 %v895, %v896
        %v905 = vadd.f32 %v880, %v897
        %v906 = vadd.f32 %v881, %v898
        %v907 = vadd.f32 %v882, %v899
        %v908 = vadd.f32 %v883, %v900
        %v909 = vadd.f32 %v884, %v901
        %v910 = vadd.f32 %v885, %v902
        %v911 = vadd.f32 %v886, %v903
        %v912 = vadd.f32 %v887, %v904
        %v913 = vld [vmem:[%s7] sm:$0x1]
        %v915 = vperm.slane %v913, 0
        %v917 = vadd.f32 %v905, %v915
        %v918 = vadd.f32 %v906, %v915
        %v919 = vadd.f32 %v907, %v915
        %v920 = vadd.f32 %v908, %v915
        %v921 = vadd.f32 %v909, %v915
        %v922 = vadd.f32 %v910, %v915
        %v923 = vadd.f32 %v911, %v915
        %v924 = vadd.f32 %v912, %v915
        %925 = vst [vmem:[%s413] sm:$0xff] %v917
        %926 = vst [vmem:[%s413 + $0x8] sm:$0xff] %v918
        %927 = vst [vmem:[%s413 + $0x10] sm:$0xff] %v919
        %928 = vst [vmem:[%s413 + $0x18] sm:$0xff] %v920
        %929 = vst [vmem:[%s413 + $0x20] sm:$0xff] %v921
        %930 = vst [vmem:[%s413 + $0x28] sm:$0xff] %v922
        %931 = vst [vmem:[%s413 + $0x30] sm:$0xff] %v923
        %932 = vst [vmem:[%s413 + $0x38] sm:$0xff] %v924
        %v933 = vadd.f32 %v917, %v918
        %v934 = vadd.f32 %v933, %v919
        %v935 = vadd.f32 %v934, %v920
        %v936 = vadd.f32 %v935, %v921
        %v937 = vadd.f32 %v936, %v922
        %v938 = vadd.f32 %v937, %v923
        %v939 = vadd.f32 %v938, %v924
        %v940 = vrot.slane %v939, 4
        %v941 = vadd.f32 %v939, %v940
        %v942 = vrot.slane %v941, 2
        %v943 = vadd.f32 %v941, %v942
        %v944 = vrot.slane %v943, 1
        %v945 = vadd.f32 %v943, %v944
        %946 = vst [vmem:[%s419] sm:$0x1] %v945
        %v947 = vmul.f32 %v917, %v917
        %v948 = vmul.f32 %v918, %v918
        %v949 = vmul.f32 %v919, %v919
        %v950 = vmul.f32 %v920, %v920
        %v951 = vmul.f32 %v921, %v921
        %v952 = vmul.f32 %v922, %v922
        %v953 = vmul.f32 %v923, %v923
        %v954 = vmul.f32 %v924, %v924
        %v955 = vadd.f32 %v947, %v948
        %v956 = vadd.f32 %v955, %v949
        %v957 = vadd.f32 %v956, %v950
        %v958 = vadd.f32 %v957, %v951
        %v959 = vadd.f32 %v958, %v952
        %v960 = vadd.f32 %v959, %v953
        %v961 = vadd.f32 %v960, %v954
        %v962 = vrot.slane %v961, 4
        %v963 = vadd.f32 %v961, %v962
        %v964 = vrot.slane %v963, 2
        %v965 = vadd.f32 %v963, %v964
        %v966 = vrot.slane %v965, 1
        %v967 = vadd.f32 %v965, %v966
        %968 = vst [vmem:[%s425] sm:$0x1] %v967
        %s969 = sand.u32 %s201, 1
        %s970 = scalar_lea.sflag [#allocation7], %s969
        %s971 = sand.u32 %s201, 1
        %s972 = smul.addr %s971, 64
        %s973 = scalar_lea.vmem [#allocation13], %s972
        %s974 = sand.u32 %s41, 1
        %s975 = scalar_lea.sflag [#allocation15], %s974
        %s976 = sand.u32 %s227, 1
        %s977 = scalar_lea.vmem [#allocation14], %s976
        %s978 = sand.u32 %s41, 1
        %s979 = scalar_lea.sflag [#allocation15], %s978
        %s980 = sand.u32 %s253, 1
        %s981 = scalar_lea.vmem [#allocation16], %s980
        // Predicated region
        $region65: #{tpu_custom_call.1} parent=47 // pred_check
          %p982 = pneg %p211
        $region66: #{tpu_custom_call.1} parent=47 // pred_check_branch
          %984 = sbr.rel (%p982) target = $region68
        $region67: #{tpu_custom_call.1} parent=47 // pred_region
          %986 = vsyncadd %s970, 0
          %s987 = smul.addr %s41, 8
          %s988 = smul.addr %s987, 8
          %s989 = scalar_lea.hbm %s8, %s988
          %s990 = sshll.u32 %s973, 4
          %s991 = int_to_ptr.vmem [resolvable:$true] %s990
          %s992 = sshll.u32 %s989, 4
          %s993 = int_to_ptr.hbm [resolvable:$true] %s992
          %998 = dma.vmem_to_hbm [thread:$0]  %s991, 1024, %s993, %s970, 128, 128, 8
        $region68: #{tpu_custom_call.1} parent=47 // pred_fallthru
          _
        // Predicated region
        $region69: #{tpu_custom_call.1} parent=47 // pred_check
          %p999 = pneg %p237
        $region70: #{tpu_custom_call.1} parent=47 // pred_check_branch
          %1001 = sbr.rel (%p999) target = $region72
        $region71: #{tpu_custom_call.1} parent=47 // pred_region
          %1003 = vsyncadd %s975, 0
          %s1004 = scalar_lea.hbm %s9, %s41
          %s1006 = sshll.u32 %s977, 4
          %s1007 = int_to_ptr.vmem [resolvable:$true] %s1006
          %s1008 = sshll.u32 %s1004, 4
          %s1009 = int_to_ptr.hbm [resolvable:$true] %s1008
          %1011 = dma.vmem_to_hbm [thread:$0]  %s1007, 16, %s1009, %s975
        $region72: #{tpu_custom_call.1} parent=47 // pred_fallthru
          _
        // Predicated region
        $region73: #{tpu_custom_call.1} parent=47 // pred_check
          %p1012 = pneg %p263
        $region74: #{tpu_custom_call.1} parent=47 // pred_check_branch
          %1014 = sbr.rel (%p1012) target = $region76
        $region75: #{tpu_custom_call.1} parent=47 // pred_region
          %1016 = vsyncadd %s979, 0
          %s1017 = scalar_lea.hbm %s10, %s41
          %s1019 = sshll.u32 %s981, 4
          %s1020 = int_to_ptr.vmem [resolvable:$true] %s1019
          %s1021 = sshll.u32 %s1017, 4
          %s1022 = int_to_ptr.hbm [resolvable:$true] %s1021
          %1024 = dma.vmem_to_hbm [thread:$0]  %s1020, 16, %s1022, %s979
        $region76: #{tpu_custom_call.1} parent=47 // pred_fallthru
          _
      $region48: #{tpu_custom_call.1} parent=5 // pred_fallthru
        _
      %p1025 = scmp.le.s32.totalorder 2, %s36
      // Predicated region
      $region77: #{tpu_custom_call.1} parent=5 // pred_check
        %p1026 = pneg %p1025
      $region78: #{tpu_custom_call.1} parent=5 // pred_check_branch
        %1028 = sbr.rel (%p1026) target = $region80
      $region79: #{tpu_custom_call.1} parent=5 // pred_region
        %s1029 = ssub.s32 %s36, 2
        // Predicated region
        $region81: #{tpu_custom_call.1} parent=79 // pred_check
          %p1030 = pneg %p217
        $region82: #{tpu_custom_call.1} parent=79 // pred_check_branch
          %1032 = sbr.rel (%p1030) target = $region84
        $region83: #{tpu_custom_call.1} parent=79 // pred_region
          %s1033 = sand.u32 %s202, 1
          %s1034 = scalar_lea.sflag [#allocation7], %s1033
          %s1035 = sand.u32 %s202, 1
          %s1036 = smul.addr %s1035, 64
          %s1037 = scalar_lea.vmem [#allocation13], %s1036
          %1039 = dma.done %s1034, 1024
        $region84: #{tpu_custom_call.1} parent=79 // pred_fallthru
          _
        // Predicated region
        $region85: #{tpu_custom_call.1} parent=79 // pred_check
          %p1040 = pneg %p243
        $region86: #{tpu_custom_call.1} parent=79 // pred_check_branch
          %1042 = sbr.rel (%p1040) target = $region88
        $region87: #{tpu_custom_call.1} parent=79 // pred_region
          %s1043 = sand.u32 %s42, 1
          %s1044 = scalar_lea.sflag [#allocation15], %s1043
          %s1045 = sand.u32 %s228, 1
          %s1046 = scalar_lea.vmem [#allocation14], %s1045
          %1048 = dma.done %s1044, 16
        $region88: #{tpu_custom_call.1} parent=79 // pred_fallthru
          _
        // Predicated region
        $region89: #{tpu_custom_call.1} parent=79 // pred_check
          %p1049 = pneg %p269
        $region90: #{tpu_custom_call.1} parent=79 // pred_check_branch
          %1051 = sbr.rel (%p1049) target = $region92
        $region91: #{tpu_custom_call.1} parent=79 // pred_region
          %s1052 = sand.u32 %s42, 1
          %s1053 = scalar_lea.sflag [#allocation15], %s1052
          %s1054 = sand.u32 %s254, 1
          %s1055 = scalar_lea.vmem [#allocation16], %s1054
          %1057 = dma.done %s1053, 16
        $region92: #{tpu_custom_call.1} parent=79 // pred_fallthru
          _
      $region80: #{tpu_custom_call.1} parent=5 // pred_fallthru
        _
    $region6: #{tpu_custom_call.1} parent=1 // loop_footer
      %s40 = sadd.s32 1, %s36
    $region7: #{tpu_custom_call.1} parent=1 // loop_footer_branch
      %35 = sbr.rel target = $region3
    $region8: #{tpu_custom_call.1} parent=1 // loop_exit
      _
    %1058 = vsyncpa [#allocation6], 1
    %s1059 = scalar_lea.sflag [#allocation6], 1
    %1060 = vsyncpa %s1059, 1
    %1061 = vsyncpa [#allocation9], 1
    %1062 = vsyncpa [#allocation12], 1
    %1063 = vsyncpa [#allocation7], 1
    %s1064 = scalar_lea.sflag [#allocation7], 1
    %1065 = vsyncpa %s1064, 1
    %1066 = vsyncpa [#allocation15], 1
    %s1067 = scalar_lea.sflag [#allocation15], 1
    %1068 = vsyncpa %s1067, 1

</llo_original>
